<compile_context>
chip_gen: v7x
topology: tpu7x:2x2x1
jax: 0.10.0
libtpu: 0.0.40
codegen_flags: <defaults>
</compile_context>

<pallas_src>
import functools

import numpy as np

import jax
import jax.numpy as jnp
from jax.experimental import pallas as pl
from jax.experimental.pallas import tpu as pltpu


def _round_up(v, m):
    return (v + m - 1) // m * m


def _sublane_multiple(dtype):
    itemsize = jnp.dtype(dtype).itemsize
    return 8 * max(1, 4 // itemsize)   # 8 for f32, 16 for bf16, 32 for int8/fp8


def _chip_vmem_bytes():
    try:
        return int(pltpu.get_tpu_info().vmem_capacity_bytes)
    except Exception:
        return 64 * 1024 * 1024        # conservative fallback (v7x per-TC VMEM)


def _conv1d_deriv_kernel(x_ref, o_ref, *, taps):
    # x_ref: VMEM [row_tile, L]       caller dtype
    # o_ref: VMEM [row_tile, L_out]   caller dtype, L_out = L - K + 1
    # taps:  K Python floats, DerFilter already scaled by 1/resol.
    l_out = o_ref.shape[-1]
    x = x_ref[...]                     # load the tile once, slice in registers
    acc = None
    for k, w in enumerate(taps):
        if w == 0.0:                   # central-difference stencils have a 0 tap
            continue
        term = w * x[:, k:k + l_out].astype(jnp.float32)
        acc = term if acc is None else acc + term
    if acc is None:                    # degenerate all-zero filter
        acc = jnp.zeros(o_ref.shape, jnp.float32)
    o_ref[...] = acc.astype(o_ref.dtype)


def conv1d_derivative(x, der_filter, resol, *, row_tile=None):
    """x: (N, 1, L); der_filter: (1, 1, K) fixed stencil; returns (N, 1, L-K+1)."""
    n, c, length = x.shape
    assert c == 1, "Conv1dDerivative uses a single input/output channel"

    # The filter is a fixed, non-trainable constant -> fold 1/resol into the
    # taps on the host and bake them into the kernel.
    filt = np.asarray(der_filter, dtype=np.float32).reshape(-1)
    taps = tuple(float(w) / float(resol) for w in filt)
    ksize = len(taps)
    l_out = length - ksize + 1
    assert l_out >= 1, "input shorter than the stencil"

    out_dtype = x.dtype
    itemsize = jnp.dtype(out_dtype).itemsize
    sub = _sublane_multiple(out_dtype)
    x2d = x.reshape(n, length)         # free: drops the size-1 channel dim

    phys_vmem = _chip_vmem_bytes()
    if row_tile is None:
        # Per-row working set: double-buffered input + output tiles, f32 temps.
        bytes_per_row = 2 * length * itemsize + 2 * l_out * itemsize + 2 * length * 4
        budget = max(8 << 20, min(phys_vmem // 3, 24 << 20))
        row_tile = max(sub, (budget // max(bytes_per_row, 1)) // sub * sub)
    row_tile = _round_up(max(int(row_tile), 1), sub)
    # Prefer >= 2 grid steps when N allows it so the "parallel" row axis can
    # span both TensorCores on v7x.
    if n > sub:
        row_tile = min(row_tile, _round_up(pl.cdiv(n, 2), sub))
    row_tile = min(row_tile, _round_up(n, sub))
    if pl.cdiv(n, row_tile) <= 1:
        # Single block: use the exact row count (full-dim block shapes are
        # always layout-legal and avoid any partial-block masking).
        row_tile = n
    grid = (pl.cdiv(n, row_tile),)
    # TODO(synk): lane-tile with a (K-1)-column halo if a single L-wide row ever
    # exceeds the VMEM budget (not the case for PhyCRNet's 1D stencils).

    nnz = sum(1 for w in taps if w != 0.0)
    cost = pl.CostEstimate(
        flops=2 * nnz * n * l_out,
        transcendentals=0,
        bytes_accessed=n * length * itemsize + n * l_out * itemsize,
    )

    out2d = pl.pallas_call(
        functools.partial(_conv1d_deriv_kernel, taps=taps),
        out_shape=jax.ShapeDtypeStruct((n, l_out), out_dtype),
        grid=grid,
        in_specs=[pl.BlockSpec((row_tile, length), lambda i: (i, 0))],
        out_specs=pl.BlockSpec((row_tile, l_out), lambda i: (i, 0)),
        compiler_params=pltpu.CompilerParams(
            dimension_semantics=("parallel",),
            vmem_limit_bytes=min(3 * phys_vmem // 4, 96 << 20),
        ),
        cost_estimate=cost,
    )(x2d)

    return out2d.reshape(n, 1, l_out)


def _reference(x, der_filter, resol):
    # Pure-JAX reference: lax conv with NCL layout, valid padding, no bias.
    out = jax.lax.conv_general_dilated(
        x.astype(jnp.float32),
        jnp.asarray(der_filter, jnp.float32),   # (O=1, I=1, K)
        window_strides=(1,),
        padding="VALID",
        dimension_numbers=("NCH", "OIH", "NCH"),
    )
    return out / resol


if __name__ == "__main__":
    # Deterministic setup matching the module's typical use:
    #   DerFilter: central-difference stencil (1, 1, 3); resol = 2 * dt.
    der_filter = [[[-1.0, 0.0, 1.0]]]
    resol = 0.004                      # e.g. 2 * dt with dt = 0.002
    kernel_size = 3

    key = jax.random.PRNGKey(0)
    N, C, L = 2, 1, 16
    x = jax.random.normal(key, (N, C, L), dtype=jnp.float32)

    out = jax.block_until_ready(conv1d_derivative(x, der_filter, resol))

    ref = jax.block_until_ready(
        _reference(x, jnp.asarray(der_filter, jnp.float32), resol))
    assert out.shape == (N, 1, L - kernel_size + 1), out.shape
    assert out.dtype == x.dtype
    assert jnp.allclose(out, ref, atol=1e-4, rtol=1e-5), "mismatch vs reference"

    print("KERNEL_OK")
</pallas_src>

<mosaic_0001>
module attributes {stable_mosaic.version = 11 : i64} {
  func.func @_conv1d_deriv_kernel(%arg0: i32, %arg1: memref<2x16xf32, #tpu.memory_space<vmem>>, %arg2: memref<2x14xf32, #tpu.memory_space<vmem>>) attributes {dimension_semantics = [#tpu.dimension_semantics<parallel>], iteration_bounds = array<i64: 1>, scalar_prefetch = 0 : i64, scratch_operands = 0 : i64, tpu.core_type = #tpu.core_type<tc>, window_params = [{transform_indices = @transform_0, window_bounds = array<i64: 2, 16>}, {transform_indices = @transform_1, window_bounds = array<i64: 2, 14>}]} {
    %c0 = arith.constant 0 : index
    %c0_0 = arith.constant 0 : index
    %0 = vector.load %arg1[%c0, %c0_0] : memref<2x16xf32, #tpu.memory_space<vmem>>, vector<2x16xf32>
    %1 = vector.extract_strided_slice %0 {offsets = [0, 0], sizes = [2, 14], strides = [1, 1]} : vector<2x16xf32> to vector<2x14xf32>
    %cst = arith.constant -2.500000e+02 : f32
    %2 = vector.broadcast %cst : f32 to vector<2x14xf32>
    %3 = arith.mulf %2, %1 : vector<2x14xf32>
    %4 = vector.extract_strided_slice %0 {offsets = [0, 2], sizes = [2, 14], strides = [1, 1]} : vector<2x16xf32> to vector<2x14xf32>
    %cst_1 = arith.constant 2.500000e+02 : f32
    %5 = vector.broadcast %cst_1 : f32 to vector<2x14xf32>
    %6 = arith.mulf %5, %4 : vector<2x14xf32>
    %7 = arith.addf %3, %6 : vector<2x14xf32>
    %c0_2 = arith.constant 0 : index
    %c0_3 = arith.constant 0 : index
    %8 = vector.load %arg2[%c0_2, %c0_3] : memref<2x14xf32, #tpu.memory_space<vmem>>, vector<2x14xf32>
    tpu.vector_store %arg2[%c0_2, %c0_3], %7 {strides = array<i32>} : memref<2x14xf32, #tpu.memory_space<vmem>>, vector<2x14xf32>,
    return
  }
  func.func @transform_0(%arg0: i32) -> (i32, i32) {
    %c0_i32 = arith.constant 0 : i32
    %c0_i32_0 = arith.constant 0 : i32
    return %arg0, %c0_i32 : i32, i32
  }
  func.func @transform_1(%arg0: i32) -> (i32, i32) {
    %c0_i32 = arith.constant 0 : i32
    %c0_i32_0 = arith.constant 0 : i32
    return %arg0, %c0_i32 : i32, i32
  }
}

</mosaic_0001>

<llo_original>
// kernel: tpu_custom_call.1
$region0: #{tpu_custom_call.1}
  #allocation0 [shape = 'u32[]', space=smem, size = 0x4, offset = 0x4, fixed_abs, tag = 'smem constant byte address 0x4 - core index']
  #allocation1 [shape = 'u32[144,128]{1,0:T(1,128)}', space=vmem, size = 0x12000, scoped, tag = 'internal scratch']
  %s0 = inlined_call_operand.hbm [shape: f32[2,16], index: 0, kind: input, shape index: {}]
  %s1 = inlined_call_operand.hbm [shape: f32[2,14], index: 1, kind: output, shape index: {}]
  %s2 = sld [smem:[#allocation0]]
  $region18: #{tpu_custom_call.1} parent=0
    _
  %s4 = ssub.s32 1, %s2
  %s5 = scalar_select 0, %s4, %s2
  $region1: #{tpu_custom_call.1} parent=0
    #allocation2 [shape = 'u8[1024]{0}', space=vmem, size = 0x400, scoped, tag = 'input window, operand 0, single buffered']
    #allocation3 [shape = 's32[1]{0}', space=sflag, size = 0x4, scoped, tag = 'scoped memory for tpu_custom_call.1']
    #allocation4 [shape = 's32[1]{0}', space=sflag, size = 0x4, scoped, tag = 'scoped memory for tpu_custom_call.1']
    #allocation5 [shape = 'u8[1024]{0}', space=vmem, size = 0x400, scoped, tag = 'output window, operand 0, single buffered']
    %6 = vsyncpa [#allocation3], 0
    %7 = vsyncpa [#allocation4], 0
    // Predicated region
    $region2: #{tpu_custom_call.1} parent=1 // pred_check
      _
    $region3: #{tpu_custom_call.1} parent=1 // pred_check_branch
      %9 = sbr.rel (0) target = $region5
    $region4: #{tpu_custom_call.1} parent=1 // pred_region
      %s11 = ssub.s32 32, 32
      %12 = vsyncadd [#allocation3], %s11
      %s14 = sshll.u32 [#allocation2], 4
      %s15 = int_to_ptr.vmem [resolvable:$true] %s14
      %17 = dma.hbm_to_vmem [thread:$0]  %s0, 32, %s15, [#allocation3]
    $region5: #{tpu_custom_call.1} parent=1 // pred_fallthru
      _
    // Predicated region
    $region6: #{tpu_custom_call.1} parent=1 // pred_check
      _
    $region7: #{tpu_custom_call.1} parent=1 // pred_check_branch
      %19 = sbr.rel (0) target = $region9
    $region8: #{tpu_custom_call.1} parent=1 // pred_region
      %20 = dma.done [#allocation3], 32
    $region9: #{tpu_custom_call.1} parent=1 // pred_fallthru
      _
    %v21 = vld [vmem:[#allocation2] sm:$0x3]
    %v22 = vmul.f32 %v21, -250.0
    %v23 = vmul.f32 %v21, 250.0
    %25 = vrot.lane.b32.xlu0 %v23, 126
    %v26 = vpop.permute.xlu0 %25
    %v28 = vadd.f32 %v22, %v26
    %vm29 = vcmask 107520
    %30 = vst.msk [vmem:[#allocation5] sm:$0x3] %vm29, %v28
    // Predicated region
    $region10: #{tpu_custom_call.1} parent=1 // pred_check
      _
    $region11: #{tpu_custom_call.1} parent=1 // pred_check_branch
      %32 = sbr.rel (0) target = $region13
    $region12: #{tpu_custom_call.1} parent=1 // pred_region
      %s34 = ssub.s32 32, 32
      %35 = vsyncadd [#allocation4], %s34
      %s37 = sshll.u32 [#allocation5], 4
      %s38 = int_to_ptr.vmem [resolvable:$true] %s37
      %40 = dma.vmem_to_hbm [thread:$0]  %s38, 32, %s1, [#allocation4]
    $region13: #{tpu_custom_call.1} parent=1 // pred_fallthru
      _
    // Predicated region
    $region14: #{tpu_custom_call.1} parent=1 // pred_check
      _
    $region15: #{tpu_custom_call.1} parent=1 // pred_check_branch
      %42 = sbr.rel (0) target = $region17
    $region16: #{tpu_custom_call.1} parent=1 // pred_region
      %43 = dma.done [#allocation4], 32
    $region17: #{tpu_custom_call.1} parent=1 // pred_fallthru
      _
    %44 = vsyncpa [#allocation3], 1
    %45 = vsyncpa [#allocation4], 1

</llo_original>
